<compile_context>
chip_gen: v7x
topology: tpu7x:2x2x1
jax: 0.10.0
libtpu: 0.0.40
codegen_flags: <defaults>
</compile_context>

<pallas_src>
import functools

import jax
import jax.numpy as jnp
from jax.experimental import pallas as pl
from jax.experimental.pallas import tpu as pltpu


_LANE = 128
_SUBLANE = 8
# Budget for the double-buffered input + output blocks of one grid step.
# Kept well below the 32 MiB scoped-VMEM limit we request so the compiler
# has headroom for in-kernel temporaries on all of v5e / v6e / v7x.
_BLOCK_BUDGET_BYTES = 8 * 1024 * 1024
_VMEM_LIMIT_BYTES = 32 * 1024 * 1024
# Only split a single-block problem in two (for v7x's two TensorCores) if
# each half still amortises the per-step pipeline overhead.
_MIN_ROWS_PER_CORE = 2048
_MIN_B_PER_CORE = 256


def _round_up(x, m):
    return ((x + m - 1) // m) * m


# ---------------------------------------------------------------------------
# dim == 3 : variance over the last (lane) axis of a (rows, L) slab
# ---------------------------------------------------------------------------
def _var_lanes_kernel(x_ref, o_ref, *, n):
    """Unbiased variance over the last axis of one (tile_rows, n) block."""
    x = x_ref[...].astype(jnp.float32)              # (tile_rows, n)
    y = x - x[:, 0:1]                               # shift by a sample
    s = jnp.sum(y, axis=-1, keepdims=True)          # (tile_rows, 1)
    q = jnp.sum(y * y, axis=-1, keepdims=True)      # (tile_rows, 1)
    # n == 1 -> 0/0 = NaN, matching torch.var with correction=1.
    var = (q - s * s * (1.0 / n)) / float(n - 1)
    o_ref[...] = var.astype(o_ref.dtype)


def _var_over_lanes(flat):
    """flat: (rows, L) -> (rows, 1), unbiased variance over axis -1."""
    rows, L = flat.shape
    isz = flat.dtype.itemsize
    lanes_in = _round_up(L, _LANE)
    # Per-row VMEM per grid step: double-buffered input block (lane-padded)
    # + double-buffered (tile_rows, 1) output block (also padded to 128 lanes).
    bytes_per_row = 2 * (lanes_in + _LANE) * isz
    tile_rows = max(_SUBLANE,
                    (_BLOCK_BUDGET_BYTES // bytes_per_row) // _SUBLANE * _SUBLANE)
    tile_rows = min(tile_rows, _round_up(rows, _SUBLANE))
    if tile_rows >= rows and rows >= 2 * _MIN_ROWS_PER_CORE:
        # Ensure >= 2 grid steps so both v7x TensorCores get work.
        tile_rows = _round_up((rows + 1) // 2, _SUBLANE)

    grid = (pl.cdiv(rows, tile_rows),)
    return pl.pallas_call(
        functools.partial(_var_lanes_kernel, n=L),
        out_shape=jax.ShapeDtypeStruct((rows, 1), flat.dtype),
        grid=grid,
        in_specs=[pl.BlockSpec((tile_rows, L), lambda i: (i, 0))],
        out_specs=pl.BlockSpec((tile_rows, 1), lambda i: (i, 0)),
        compiler_params=pltpu.CompilerParams(
            dimension_semantics=("parallel",),
            vmem_limit_bytes=_VMEM_LIMIT_BYTES),
    )(flat)


# ---------------------------------------------------------------------------
# dim == 2 : variance over the strideFactor (sublane) axis of (BF, S, L)
# ---------------------------------------------------------------------------
def _var_sublanes_kernel(x_ref, o_ref, *, n):
    """Unbiased variance over axis 1 of one (tile_b, n, L) block."""
    x = x_ref[...].astype(jnp.float32)              # (tile_b, n, L)
    x0 = x[:, 0:1, :]                               # shift by a sample
    s = jnp.zeros_like(x0)
    q = jnp.zeros_like(x0)
    # n == strideFactor is a small compile-time constant (typically 4); an
    # unrolled elementwise loop avoids relying on cross-sublane reduction
    # lowering.  j == 0 contributes zero after the shift, so skip it.
    for j in range(1, n):
        y = x[:, j:j + 1, :] - x0
        s = s + y
        q = q + y * y
    var = (q - s * s * (1.0 / n)) / float(n - 1)    # n == 1 -> NaN (torch-like)
    o_ref[...] = var.astype(o_ref.dtype)


def _var_over_sublanes(x3):
    """x3: (BF, S, L) -> (BF, 1, L), unbiased variance over axis 1."""
    BF, S, L = x3.shape
    isz = x3.dtype.itemsize
    sub_in = _round_up(S, _SUBLANE)
    lanes = _round_up(L, _LANE)
    # Double-buffered input (S padded to 8 sublanes) + double-buffered
    # (tile_b, 1, L) output (1 padded to 8 sublanes), both lane-padded.
    bytes_per_b = 2 * (sub_in + _SUBLANE) * lanes * isz
    tile_b = max(1, _BLOCK_BUDGET_BYTES // bytes_per_b)
    tile_b = min(tile_b, BF)
    if tile_b >= BF and BF >= 2 * _MIN_B_PER_CORE:
        tile_b = (BF + 1) // 2                      # 2 steps -> both v7x cores

    grid = (pl.cdiv(BF, tile_b),)
    return pl.pallas_call(
        functools.partial(_var_sublanes_kernel, n=S),
        out_shape=jax.ShapeDtypeStruct((BF, 1, L), x3.dtype),
        grid=grid,
        in_specs=[pl.BlockSpec((tile_b, S, L), lambda i: (i, 0, 0))],
        out_specs=pl.BlockSpec((tile_b, 1, L), lambda i: (i, 0, 0)),
        compiler_params=pltpu.CompilerParams(
            dimension_semantics=("parallel",),
            vmem_limit_bytes=_VMEM_LIMIT_BYTES),
    )(x3)


# ---------------------------------------------------------------------------
# Public wrapper (= ReshapeAndVarLayer.forward)
# ---------------------------------------------------------------------------
def reshape_and_var(x, *, dim, feature, strideFactor=4):
    """JAX/Pallas equivalent of ReshapeAndVarLayer.forward.

    x: (N, C, H, W) (NCHW, as produced by PyTorch convs).
    Returns x.reshape(-1, feature, strideFactor, W // strideFactor)
             .var(dim=dim, keepdim=True) with unbiased (ddof=1) variance.
    """
    W = x.shape[3]
    L = W // strideFactor
    total = x.size
    B = total // (feature * strideFactor * L)

    if dim == 3:
        flat = x.reshape(B * feature * strideFactor, L)   # free, row-major
        var = _var_over_lanes(flat)                       # (B*F*S, 1)
        return var.reshape(B, feature, strideFactor, 1)
    elif dim == 2:
        x3 = x.reshape(B * feature, strideFactor, L)      # free, row-major
        var = _var_over_sublanes(x3)                      # (B*F, 1, L)
        return var.reshape(B, feature, 1, L)
    else:
        # TODO(synk): variance over dims 0/1 (batch / feature) is not used by
        # TSFCNet; only dim in {2, 3} is implemented here.
        raise NotImplementedError(f"dim={dim} not supported")


if __name__ == "__main__":
    # Small shapes consistent with the module's usage:
    # x: (N=2, C=4, H=1, W=64), feature=4, strideFactor=4.
    key = jax.random.PRNGKey(0)
    N, C, H, W = 2, 4, 1, 64
    feature, strideFactor = 4, 4
    x = jax.random.normal(key, (N, C, H, W), dtype=jnp.float32)

    x4 = x.reshape(-1, feature, strideFactor, W // strideFactor)

    # Exercise both reduction paths used by TSFCNet (var over dim 3 and dim 2)
    # and check against the unbiased-variance reference.
    for dim in (3, 2):
        out = reshape_and_var(x, dim=dim, feature=feature,
                              strideFactor=strideFactor)
        out = jax.block_until_ready(out)
        ref = jnp.var(x4, axis=dim, keepdims=True, ddof=1)
        assert out.shape == ref.shape, (dim, out.shape, ref.shape)
        assert jnp.allclose(out, ref, atol=1e-5, rtol=1e-5), (
            dim, float(jnp.max(jnp.abs(out - ref))))

    print("KERNEL_OK")
</pallas_src>

<mosaic_0001>
module attributes {stable_mosaic.version = 11 : i64} {
  func.func @_var_lanes_kernel(%arg0: i32, %arg1: memref<32x16xf32, #tpu.memory_space<vmem>>, %arg2: memref<32x1xf32, #tpu.memory_space<vmem>>) attributes {dimension_semantics = [#tpu.dimension_semantics<parallel>], iteration_bounds = array<i64: 1>, scalar_prefetch = 0 : i64, scratch_operands = 0 : i64, tpu.core_type = #tpu.core_type<tc>, window_params = [{transform_indices = @transform_0, window_bounds = array<i64: 32, 16>}, {transform_indices = @transform_1, window_bounds = array<i64: 32, 1>}]} {
    %c0 = arith.constant 0 : index
    %c0_0 = arith.constant 0 : index
    %0 = vector.load %arg1[%c0, %c0_0] : memref<32x16xf32, #tpu.memory_space<vmem>>, vector<32x16xf32>
    %1 = vector.extract_strided_slice %0 {offsets = [0, 0], sizes = [32, 1], strides = [1, 1]} : vector<32x16xf32> to vector<32x1xf32>
    %2 = vector.broadcast %1 : vector<32x1xf32> to vector<32x16xf32>
    %3 = arith.subf %0, %2 : vector<32x16xf32>
    %cst = arith.constant dense<0.000000e+00> : vector<32xf32>
    %4 = vector.multi_reduction <add>, %3, %cst [1] : vector<32x16xf32> to vector<32xf32>
    %5 = vector.shape_cast %4 : vector<32xf32> to vector<32x1xf32>
    %6 = arith.mulf %3, %3 : vector<32x16xf32>
    %cst_1 = arith.constant dense<0.000000e+00> : vector<32xf32>
    %7 = vector.multi_reduction <add>, %6, %cst_1 [1] : vector<32x16xf32> to vector<32xf32>
    %8 = vector.shape_cast %7 : vector<32xf32> to vector<32x1xf32>
    %9 = arith.mulf %5, %5 : vector<32x1xf32>
    %cst_2 = arith.constant 6.250000e-02 : f32
    %10 = vector.broadcast %cst_2 : f32 to vector<32x1xf32>
    %11 = arith.mulf %9, %10 : vector<32x1xf32>
    %12 = arith.subf %8, %11 : vector<32x1xf32>
    %cst_3 = arith.constant 1.500000e+01 : f32
    %13 = vector.broadcast %cst_3 : f32 to vector<32x1xf32>
    %14 = arith.divf %12, %13 : vector<32x1xf32>
    %c0_4 = arith.constant 0 : index
    %c0_5 = arith.constant 0 : index
    %15 = vector.load %arg2[%c0_4, %c0_5] : memref<32x1xf32, #tpu.memory_space<vmem>>, vector<32x1xf32>
    tpu.vector_store %arg2[%c0_4, %c0_5], %14 {strides = array<i32>} : memref<32x1xf32, #tpu.memory_space<vmem>>, vector<32x1xf32>,
    return
  }
  func.func @transform_0(%arg0: i32) -> (i32, i32) {
    %c0_i32 = arith.constant 0 : i32
    %c0_i32_0 = arith.constant 0 : i32
    return %arg0, %c0_i32 : i32, i32
  }
  func.func @transform_1(%arg0: i32) -> (i32, i32) {
    %c0_i32 = arith.constant 0 : i32
    %c0_i32_0 = arith.constant 0 : i32
    return %arg0, %c0_i32 : i32, i32
  }
}

</mosaic_0001>

<llo_original>
// kernel: tpu_custom_call.1
$region0: #{tpu_custom_call.1}
  #allocation0 [shape = 'u32[]', space=smem, size = 0x4, offset = 0x4, fixed_abs, tag = 'smem constant byte address 0x4 - core index']
  #allocation1 [shape = 'u32[144,128]{1,0:T(1,128)}', space=vmem, size = 0x12000, scoped, tag = 'internal scratch']
  %s0 = inlined_call_operand.vmem [shape: f32[32,16], index: 0, kind: input, shape index: {}]
  %s1 = inlined_call_operand.vmem [shape: f32[32,1], index: 1, kind: output, shape index: {}]
  %s2 = sld [smem:[#allocation0]]
  $region14: #{tpu_custom_call.1} parent=0
    _
  %s4 = ssub.s32 1, %s2
  %s5 = scalar_select 0, %s4, %s2
  // Predicated region
  $region2: #{tpu_custom_call.1} parent=0 // pred_check
    _
  $region3: #{tpu_custom_call.1} parent=0 // pred_check_branch
    %7 = sbr.rel (0) target = $region5
  $region4: #{tpu_custom_call.1} parent=0 // pred_region
    _
  $region5: #{tpu_custom_call.1} parent=0 // pred_fallthru
    _
  %v8 = vld [vmem:[%s0] sm:$0xff]
  %v9 = vld [vmem:[%s0 + $0x8] sm:$0xff]
  %v10 = vld [vmem:[%s0 + $0x10] sm:$0xff]
  %v11 = vld [vmem:[%s0 + $0x18] sm:$0xff]
  %13 = vset.pattern.permute.xlu0 0
  %14 = vperm.xlu0 %13, %v8
  %v15 = vpop.permute.xlu0 %14
  %18 = vset.pattern.permute.xlu0 0
  %19 = vperm.xlu0 %18, %v9
  %v20 = vpop.permute.xlu0 %19
  %23 = vset.pattern.permute.xlu0 0
  %24 = vperm.xlu0 %23, %v10
  %v25 = vpop.permute.xlu0 %24
  %28 = vset.pattern.permute.xlu0 0
  %29 = vperm.xlu0 %28, %v11
  %v30 = vpop.permute.xlu0 %29
  %v32 = vsub.f32 %v8, %v15
  %v33 = vsub.f32 %v9, %v20
  %v34 = vsub.f32 %v10, %v25
  %v35 = vsub.f32 %v11, %v30
  %vm36 = vcmask 130048
  %v37 = vsel %vm36, %v32, 0.0
  %38 = vadd.xlane.f32.xlu0 %v37
  %v39 = vpop.xlane.xlu0 %38
  %v40 = vsel %vm36, %v33, 0.0
  %41 = vadd.xlane.f32.xlu0 %v40
  %v42 = vpop.xlane.xlu0 %41
  %v43 = vsel %vm36, %v34, 0.0
  %44 = vadd.xlane.f32.xlu0 %v43
  %v45 = vpop.xlane.xlu0 %44
  %v46 = vsel %vm36, %v35, 0.0
  %47 = vadd.xlane.f32.xlu0 %v46
  %v48 = vpop.xlane.xlu0 %47
  %v49 = vmul.f32 %v32, %v32
  %v50 = vmul.f32 %v33, %v33
  %v51 = vmul.f32 %v34, %v34
  %v52 = vmul.f32 %v35, %v35
  %v53 = vsel %vm36, %v49, 0.0
  %54 = vadd.xlane.f32.xlu0 %v53
  %v55 = vpop.xlane.xlu0 %54
  %v56 = vsel %vm36, %v50, 0.0
  %57 = vadd.xlane.f32.xlu0 %v56
  %v58 = vpop.xlane.xlu0 %57
  %v59 = vsel %vm36, %v51, 0.0
  %60 = vadd.xlane.f32.xlu0 %v59
  %v61 = vpop.xlane.xlu0 %60
  %v62 = vsel %vm36, %v52, 0.0
  %63 = vadd.xlane.f32.xlu0 %v62
  %v64 = vpop.xlane.xlu0 %63
  %v65 = vmul.f32 %v39, %v39
  %v66 = vmul.f32 %v42, %v42
  %v67 = vmul.f32 %v45, %v45
  %v68 = vmul.f32 %v48, %v48
  %v69 = vmul.f32 %v65, 0.0625
  %v70 = vmul.f32 %v66, 0.0625
  %v71 = vmul.f32 %v67, 0.0625
  %v72 = vmul.f32 %v68, 0.0625
  %v73 = vsub.f32 %v55, %v69
  %v74 = vsub.f32 %v58, %v70
  %v75 = vsub.f32 %v61, %v71
  %v76 = vsub.f32 %v64, %v72
  %v77 = vrcp.pop 15.0
  %v78 = vmul.f32 %v73, %v77
  %v79 = vmul.f32 %v74, %v77
  %v80 = vmul.f32 %v75, %v77
  %v81 = vmul.f32 %v76, %v77
  %vm82 = vcmask 7168
  %83 = vst.msk [vmem:[%s1] sm:$0xff] %vm82, %v78
  %84 = vst.msk [vmem:[%s1 + $0x8] sm:$0xff] %vm82, %v79
  %85 = vst.msk [vmem:[%s1 + $0x10] sm:$0xff] %vm82, %v80
  %86 = vst.msk [vmem:[%s1 + $0x18] sm:$0xff] %vm82, %v81
  // Predicated region
  $region6: #{tpu_custom_call.1} parent=0 // pred_check
    _
  $region7: #{tpu_custom_call.1} parent=0 // pred_check_branch
    %88 = sbr.rel (0) target = $region9
  $region8: #{tpu_custom_call.1} parent=0 // pred_region
    _
  $region9: #{tpu_custom_call.1} parent=0 // pred_fallthru
    _
  // Predicated region
  $region10: #{tpu_custom_call.1} parent=0 // pred_check
    _
  $region11: #{tpu_custom_call.1} parent=0 // pred_check_branch
    %90 = sbr.rel (0) target = $region13
  $region12: #{tpu_custom_call.1} parent=0 // pred_region
    _
  $region13: #{tpu_custom_call.1} parent=0 // pred_fallthru
    _

</llo_original>
